<compile_context>
chip_gen: v5e
topology: v5e:2x2
jax: 0.10.0
libtpu: 0.0.40
codegen_flags: <defaults>
</compile_context>

<pallas_src>
import functools

import jax
import jax.numpy as jnp
from jax import lax
from jax.experimental import pallas as pl
from jax.experimental.pallas import tpu as pltpu

IGNORE_INDEX = -100
EPS = 1e-10

# Lane assignment of the per-(batch-block, stage) partial-sum vector.
_LANE_BACKBONE = 0   # sum_n cls_loss_n / (psn_n + eps)          (stage 0, chunk 0 only)
_LANE_CE = 1         # sum_{n,t} ce / (psn_n + eps)              (every stage / chunk)
_LANE_SMOOTH = 2     # sum clamp(dlogp^2, 16) * mask             (every stage / chunk)
_LANE_VALID = 3      # number of valid frames                    (stage 0 rows only)


def _stream_seg_partial_kernel(
    num_t_chunks,     # static python int (bound via functools.partial)
    bscore_ref,       # [BN, C]     backbone clip logits
    blab_ref,         # [BN, Tb]    sub-sampled labels (int32)
    psn_ref,          # [BN, 1]     precise_sliding_num (f32)
    head_ref,         # [BN, C, TT] head logits, current (stage, time-chunk)
    labels_ref,       # [BN, TT]    labels (int32)
    masks_ref,        # [BN, TT]    masks (f32)
    out_ref,          # [1, 128]    per-(block, stage) partial sums (resident over chunks)
    prev_ref,         # [BN, C]     f32 scratch: last log-prob column of previous chunk
):
    stage = pl.program_id(1)
    tchunk = pl.program_id(2)

    lab = labels_ref[...]                                     # [BN, TT] int32
    msk = masks_ref[...].astype(jnp.float32)                  # [BN, TT]
    psn = psn_ref[...].astype(jnp.float32)                    # [BN, 1]
    BN, TT = lab.shape
    C = head_ref.shape[1]

    valid = lab != IGNORE_INDEX
    valid_f = jnp.where(valid, 1.0, 0.0)                      # [BN, TT]

    # ---- log-softmax over classes (bf16 HBM input upcast to f32 in VMEM) ----
    p = head_ref[...].astype(jnp.float32)                     # [BN, C, TT]
    pz = p - jnp.max(p, axis=1, keepdims=True)
    logp = pz - jnp.log(jnp.sum(jnp.exp(pz), axis=1, keepdims=True))   # [BN, C, TT]

    # ---- frame CE with ignore_index; no one-hot tensor is materialized ------
    cls3 = lax.broadcasted_iota(jnp.int32, (BN, C, TT), 1)
    hit = jnp.logical_and(lab[:, None, :] == cls3, valid[:, None, :])
    ce = -jnp.sum(jnp.where(hit, logp, 0.0), axis=1)          # [BN, TT]
    ce_part = jnp.sum(jnp.sum(ce, axis=1, keepdims=True) / (psn + EPS),
                      axis=0, keepdims=True)                  # (1, 1)

    # ---- temporal smoothing: roll (XLU) instead of unaligned lane slices ----
    if TT % 128 == 0:
        nxt = pltpu.roll(logp, shift=TT - 1, axis=2)          # nxt[t] = logp[t+1] (wraps)
        wmask = pltpu.roll(msk, shift=TT - 1, axis=1)         # mask[t+1] (wraps)
        lane_t = lax.broadcasted_iota(jnp.int32, (BN, TT), 1)
        wmask = jnp.where(lane_t < TT - 1, wmask, 0.0)        # kill the wrap column
        d = nxt - logp
        sq = jnp.minimum(d * d, 16.0) * wmask[:, None, :]
    else:
        # lane-unaligned chunk widths (only possible when the full T fits in one
        # chunk): keep the original sliced formulation.
        d = logp[:, :, 1:] - logp[:, :, :-1]
        sq = jnp.minimum(d * d, 16.0) * msk[:, None, 1:]
    smooth_part = jnp.sum(jnp.sum(jnp.sum(sq, axis=2), axis=1, keepdims=True),
                          axis=0, keepdims=True)              # (1, 1)

    lane = lax.broadcasted_iota(jnp.int32, (1, 128), 1)
    head_vec = (jnp.where(lane == _LANE_CE, ce_part, 0.0)
                + jnp.where(lane == _LANE_SMOOTH, smooth_part, 0.0))

    @pl.when(tchunk == 0)
    def _():
        out_ref[...] = head_vec

    if num_t_chunks > 1:
        @pl.when(tchunk != 0)
        def _():
            # cross-chunk boundary diff: logp at this chunk's first frame minus the
            # previous chunk's last frame, weighted by this chunk's first mask value.
            db = logp[:, :, 0] - prev_ref[...]                # [BN, C]
            sqb = jnp.minimum(db * db, 16.0) * msk[:, 0:1]
            b_part = jnp.sum(jnp.sum(sqb, axis=1, keepdims=True),
                             axis=0, keepdims=True)           # (1, 1)
            out_ref[...] = (out_ref[...] + head_vec
                            + jnp.where(lane == _LANE_SMOOTH, b_part, 0.0))

        # carry this chunk's last log-prob column to the next chunk
        prev_ref[...] = logp[:, :, TT - 1]

    # ---- backbone loss + valid-frame count: stage-0 rows only ----------------
    @pl.when(stage == 0)
    def _():
        vcount = jnp.sum(jnp.sum(valid_f, axis=1, keepdims=True),
                         axis=0, keepdims=True)               # (1, 1)
        out_ref[...] = out_ref[...] + jnp.where(lane == _LANE_VALID, vcount, 0.0)

        @pl.when(tchunk == 0)
        def _():
            bscore = bscore_ref[...].astype(jnp.float32)      # [BN, C]
            blab = blab_ref[...]                              # [BN, Tb]
            Tb = blab.shape[1]
            valid_b = blab != IGNORE_INDEX
            clsb = lax.broadcasted_iota(jnp.int32, (BN, C, Tb), 1)
            hitb = jnp.logical_and(blab[:, None, :] == clsb, valid_b[:, None, :])
            counts = jnp.sum(jnp.where(hitb, 1.0, 0.0), axis=2)      # [BN, C]
            smooth_label = counts * (1.0 / float(Tb))
            sample_mask = jnp.where(
                jnp.sum(smooth_label, axis=1, keepdims=True) > 0.0, 1.0, 0.0)

            bmax = jnp.max(bscore, axis=1, keepdims=True)
            bz = bscore - bmax
            blse = jnp.log(jnp.sum(jnp.exp(bz), axis=1, keepdims=True))
            blogp = bz - blse
            cls_loss = -jnp.sum(blogp * smooth_label, axis=1, keepdims=True) * sample_mask
            b_part = jnp.sum(cls_loss / (psn + EPS), axis=0, keepdims=True)   # (1, 1)
            out_ref[...] = out_ref[...] + jnp.where(lane == _LANE_BACKBONE, b_part, 0.0)


def _round_up(x, m):
    return -(-x // m) * m


def _choose_tiles(n, c, t, itemsize, blk_budget):
    """Pick (BN, N_pad, TT, T_pad) so the head block is ~blk_budget bytes and every
    BlockSpec obeys the (8, 128) rule (BN is a multiple of 8 or the full batch; TT
    is a multiple of 128 or the full time extent)."""
    bn_opts = sorted({d for d in range(8, n + 1, 8) if n % d == 0} | {n})

    def blk_bytes(bn, tt):
        return bn * c * tt * itemsize

    # 1) full-T blocks: largest batch tile that fits the budget
    for bn in reversed(bn_opts):
        if blk_bytes(bn, t) <= blk_budget:
            return bn, n, t, t
    # 2) time tiling (TT multiple of 128): smallest batch tile -> largest TT
    for bn in bn_opts:
        tt = (blk_budget // (bn * c * itemsize)) // 128 * 128
        if tt >= 128:
            return bn, n, int(tt), _round_up(t, int(tt))
    # 3) fallback: pad batch to a multiple of 8 rows, minimum legal tiles
    n_pad = _round_up(max(n, 8), 8)
    return 8, n_pad, 128, _round_up(t, 128)


def stream_segmentation_loss(backbone_score, head_score, masks, labels,
                             precise_sliding_num, *, num_classes,
                             sample_rate=4, backbone_loss_weight=1.0,
                             head_loss_weight=1.0, smooth_weight=0.15,
                             head_hbm_dtype=jnp.bfloat16,
                             _tile_budget_bytes=None):
    S, N, C, T = head_score.shape
    assert C == num_classes
    assert T >= 2, "temporal smoothing needs at least two frames"

    labels = labels.astype(jnp.int32)
    masks = masks.astype(jnp.float32)
    labels_sub = labels[:, ::sample_rate]                     # from the ORIGINAL labels
    Tb = labels_sub.shape[1]
    psn = precise_sliding_num.astype(jnp.float32).reshape(N, 1)

    # Halve HBM bytes on the only large input; the kernel upcasts to f32 in VMEM.
    # Pass head_hbm_dtype=None to keep the incoming dtype bit-exact.
    if head_hbm_dtype is not None and head_score.dtype != jnp.dtype(head_hbm_dtype):
        head_score = head_score.astype(head_hbm_dtype)
    itemsize = jnp.dtype(head_score.dtype).itemsize

    # Per-generation VMEM budget (v7x: 64 MiB physical; v5e/v6e: 128 MiB).
    try:
        vmem_cap = int(pltpu.get_tpu_info().vmem_capacity_bytes)
    except Exception:
        vmem_cap = 128 << 20
    if vmem_cap <= (64 << 20):
        blk_budget, vmem_ceiling = 2 << 20, 40 << 20
    else:
        blk_budget, vmem_ceiling = 4 << 20, 64 << 20
    if _tile_budget_bytes is not None:
        blk_budget = int(_tile_budget_bytes)

    BN, N_pad, TT, T_pad = _choose_tiles(N, C, T, itemsize, blk_budget)

    if T_pad != T:
        dt = T_pad - T
        labels = jnp.pad(labels, ((0, 0), (0, dt)), constant_values=IGNORE_INDEX)
        masks = jnp.pad(masks, ((0, 0), (0, dt)))
        head_score = jnp.pad(head_score, ((0, 0), (0, 0), (0, 0), (0, dt)))
    if N_pad != N:
        dn = N_pad - N
        backbone_score = jnp.pad(backbone_score, ((0, dn), (0, 0)))
        labels_sub = jnp.pad(labels_sub, ((0, dn), (0, 0)), constant_values=IGNORE_INDEX)
        psn = jnp.pad(psn, ((0, dn), (0, 0)), constant_values=1.0)
        labels = jnp.pad(labels, ((0, dn), (0, 0)), constant_values=IGNORE_INDEX)
        masks = jnp.pad(masks, ((0, dn), (0, 0)))
        head_score = jnp.pad(head_score, ((0, 0), (0, dn), (0, 0), (0, 0)))

    G = N_pad // BN
    KT = T_pad // TT
    grid = (G, S, KT)

    # double-buffered head block + live f32 compute temporaries + side inputs
    est = (BN * C * TT * (2 * itemsize + 6 * 4)
           + 2 * BN * TT * 8 + BN * (C + Tb + 2) * 8 + (2 << 20))
    vmem_limit = int(min(vmem_ceiling, max(16 << 20, int(1.5 * est))))

    cost = pl.CostEstimate(
        flops=int(12 * S * N_pad * C * T_pad),
        transcendentals=int(S * N_pad * C * T_pad),
        bytes_accessed=int(S * N_pad * C * T_pad * itemsize
                           + N_pad * T_pad * 8 + N_pad * (C + Tb) * 4))

    kernel = functools.partial(_stream_seg_partial_kernel, KT)

    out = pl.pallas_call(
        kernel,
        grid=grid,
        in_specs=[
            pl.BlockSpec((BN, C), lambda i, s, tt: (i, 0)),                  # backbone_score
            pl.BlockSpec((BN, Tb), lambda i, s, tt: (i, 0)),                 # sub-sampled labels
            pl.BlockSpec((BN, 1), lambda i, s, tt: (i, 0)),                  # precise_sliding_num
            pl.BlockSpec((None, BN, C, TT), lambda i, s, tt: (s, i, 0, tt)),  # head logits
            pl.BlockSpec((BN, TT), lambda i, s, tt: (i, tt)),                # labels
            pl.BlockSpec((BN, TT), lambda i, s, tt: (i, tt)),                # masks
        ],
        out_specs=pl.BlockSpec((None, None, 1, 128), lambda i, s, tt: (i, s, 0, 0)),
        out_shape=jax.ShapeDtypeStruct((G, S, 1, 128), jnp.float32),
        scratch_shapes=[pltpu.VMEM((BN, C), jnp.float32)],
        compiler_params=pltpu.CompilerParams(
            dimension_semantics=("parallel", "parallel", "arbitrary"),
            vmem_limit_bytes=vmem_limit),
        cost_estimate=cost,
    )(backbone_score, labels_sub, psn, head_score, labels, masks)

    # Cheap scalar finalization of the per-(block, stage) partial sums.
    partials = jnp.sum(out[:, :, 0, :], axis=(0, 1))          # [128]
    backbone_loss = backbone_loss_weight * partials[_LANE_BACKBONE] / float(N)
    ce_term = partials[_LANE_CE] / (partials[_LANE_VALID] + EPS)
    smooth_term = smooth_weight * partials[_LANE_SMOOTH] / float(N * C * (T - 1))
    head_loss = head_loss_weight * (ce_term + smooth_term)
    loss = backbone_loss + head_loss
    return {"loss": loss, "backbone_loss": backbone_loss, "head_loss": head_loss}


if __name__ == "__main__":
    key = jax.random.PRNGKey(0)
    k1, k2, k3 = jax.random.split(key, 3)

    num_classes = 11
    num_stages = 4
    batch = 2
    seq = 256
    sample_rate = 4

    backbone_score = jax.random.normal(k1, (batch, num_classes), jnp.float32)
    head_score = jax.random.normal(k2, (num_stages, batch, num_classes, seq), jnp.float32)
    labels = jax.random.randint(k3, (batch, seq), 0, num_classes).astype(jnp.int32)
    # mark a few frames as ignored to exercise ignore_index handling
    labels = labels.at[0, seq - 16:].set(IGNORE_INDEX)
    masks = (labels != IGNORE_INDEX).astype(jnp.float32)
    precise_sliding_num = jnp.array([1.0, 2.0], jnp.float32)

    out = stream_segmentation_loss(
        backbone_score, head_score, masks, labels, precise_sliding_num,
        num_classes=num_classes, sample_rate=sample_rate,
        backbone_loss_weight=1.0, head_loss_weight=1.0, smooth_weight=0.15)
    jax.block_until_ready(out)

    # Self-consistency check of the time-chunked path (forces KT > 1 via a tiny
    # tile budget); same math, different grouping, so results must match closely.
    out_chunked = stream_segmentation_loss(
        backbone_score, head_score, masks, labels, precise_sliding_num,
        num_classes=num_classes, sample_rate=sample_rate,
        backbone_loss_weight=1.0, head_loss_weight=1.0, smooth_weight=0.15,
        _tile_budget_bytes=8192)
    jax.block_until_ready(out_chunked)
    for k in ("loss", "backbone_loss", "head_loss"):
        assert jnp.allclose(out[k], out_chunked[k], rtol=1e-3, atol=1e-5), (
            k, out[k], out_chunked[k])

    print("KERNEL_OK")
</pallas_src>

<mosaic_0001>
module attributes {stable_mosaic.version = 11 : i64} {
  func.func @_stream_seg_partial_kernel(%arg0: i32, %arg1: i32, %arg2: i32, %arg3: memref<2x11xf32, #tpu.memory_space<vmem>>, %arg4: memref<2x64xi32, #tpu.memory_space<vmem>>, %arg5: memref<2x1xf32, #tpu.memory_space<vmem>>, %arg6: memref<1x2x11x256xbf16, #tpu.memory_space<vmem>>, %arg7: memref<2x256xi32, #tpu.memory_space<vmem>>, %arg8: memref<2x256xf32, #tpu.memory_space<vmem>>, %arg9: memref<1x1x1x128xf32, #tpu.memory_space<vmem>>, %arg10: memref<2x11xf32, #tpu.memory_space<vmem>>) attributes {dimension_semantics = [#tpu.dimension_semantics<parallel>, #tpu.dimension_semantics<parallel>, #tpu.dimension_semantics<arbitrary>], iteration_bounds = array<i64: 1, 4, 1>, scalar_prefetch = 0 : i64, scratch_operands = 1 : i64, tpu.core_type = #tpu.core_type<tc>, window_params = [{transform_indices = @transform_0, window_bounds = array<i64: 2, 11>}, {transform_indices = @transform_1, window_bounds = array<i64: 2, 64>}, {transform_indices = @transform_2, window_bounds = array<i64: 2, 1>}, {transform_indices = @transform_3, window_bounds = array<i64: 1, 2, 11, 256>}, {transform_indices = @transform_4, window_bounds = array<i64: 2, 256>}, {transform_indices = @transform_5, window_bounds = array<i64: 2, 256>}, {transform_indices = @transform_6, window_bounds = array<i64: 1, 1, 1, 128>}]} {
    %c0 = arith.constant 0 : index
    %c0_0 = arith.constant 0 : index
    %0 = vector.load %arg7[%c0, %c0_0] : memref<2x256xi32, #tpu.memory_space<vmem>>, vector<2x256xi32>
    %c0_1 = arith.constant 0 : index
    %c0_2 = arith.constant 0 : index
    %1 = vector.load %arg8[%c0_1, %c0_2] : memref<2x256xf32, #tpu.memory_space<vmem>>, vector<2x256xf32>
    %c0_3 = arith.constant 0 : index
    %c0_4 = arith.constant 0 : index
    %2 = vector.load %arg5[%c0_3, %c0_4] : memref<2x1xf32, #tpu.memory_space<vmem>>, vector<2x1xf32>
    %c-100_i32 = arith.constant -100 : i32
    %3 = vector.broadcast %c-100_i32 : i32 to vector<2x256xi32>
    %4 = arith.cmpi ne, %0, %3 : vector<2x256xi32>
    %cst = arith.constant 1.000000e+00 : f32
    %cst_5 = arith.constant 0.000000e+00 : f32
    %5 = vector.broadcast %cst : f32 to vector<2x256xf32>
    %6 = vector.broadcast %cst_5 : f32 to vector<2x256xf32>
    %7 = arith.select %4, %5, %6 : vector<2x256xi1>, vector<2x256xf32>
    %c0_6 = arith.constant 0 : index
    %c0_7 = arith.constant 0 : index
    %c0_8 = arith.constant 0 : index
    %c0_9 = arith.constant 0 : index
    %8 = vector.load %arg6[%c0_6, %c0_7, %c0_8, %c0_9] : memref<1x2x11x256xbf16, #tpu.memory_space<vmem>>, vector<1x2x11x256xbf16>
    %9 = vector.shape_cast %8 : vector<1x2x11x256xbf16> to vector<2x11x256xbf16>
    %10 = arith.extf %9 : vector<2x11x256xbf16> to vector<2x11x256xf32>
    %cst_10 = arith.constant dense<0xFF800000> : vector<2x256xf32>
    %11 = vector.multi_reduction <maximumf>, %10, %cst_10 [1] : vector<2x11x256xf32> to vector<2x256xf32>
    %12 = vector.shape_cast %11 : vector<2x256xf32> to vector<2x1x256xf32>
    %13 = vector.broadcast %12 : vector<2x1x256xf32> to vector<2x11x256xf32>
    %14 = arith.subf %10, %13 : vector<2x11x256xf32>
    %15 = math.exp %14 : vector<2x11x256xf32>
    %cst_11 = arith.constant dense<0.000000e+00> : vector<2x256xf32>
    %16 = vector.multi_reduction <add>, %15, %cst_11 [1] : vector<2x11x256xf32> to vector<2x256xf32>
    %17 = vector.shape_cast %16 : vector<2x256xf32> to vector<2x1x256xf32>
    %18 = math.log %17 : vector<2x1x256xf32>
    %19 = vector.broadcast %18 : vector<2x1x256xf32> to vector<2x11x256xf32>
    %20 = arith.subf %14, %19 : vector<2x11x256xf32>
    %21 = tpu.iota {dimensions = array<i32: 1>} : vector<2x11x256xi32>
    %22 = vector.shape_cast %0 : vector<2x256xi32> to vector<2x1x256xi32>
    %23 = vector.broadcast %22 : vector<2x1x256xi32> to vector<2x11x256xi32>
    %24 = arith.cmpi eq, %23, %21 : vector<2x11x256xi32>
    %25 = vector.shape_cast %4 : vector<2x256xi1> to vector<2x1x256xi1>
    %26 = vector.broadcast %25 : vector<2x1x256xi1> to vector<2x11x256xi1>
    %27 = arith.andi %24, %26 : vector<2x11x256xi1>
    %cst_12 = arith.constant 0.000000e+00 : f32
    %28 = vector.broadcast %cst_12 : f32 to vector<2x11x256xf32>
    %29 = arith.select %27, %20, %28 : vector<2x11x256xi1>, vector<2x11x256xf32>
    %cst_13 = arith.constant dense<0.000000e+00> : vector<2x256xf32>
    %30 = vector.multi_reduction <add>, %29, %cst_13 [1] : vector<2x11x256xf32> to vector<2x256xf32>
    %cst_14 = arith.constant 0.000000e+00 : f32
    %31 = vector.broadcast %cst_14 : f32 to vector<2x256xf32>
    %32 = arith.subf %31, %30 : vector<2x256xf32>
    %cst_15 = arith.constant dense<0.000000e+00> : vector<2xf32>
    %33 = vector.multi_reduction <add>, %32, %cst_15 [1] : vector<2x256xf32> to vector<2xf32>
    %34 = vector.shape_cast %33 : vector<2xf32> to vector<2x1xf32>
    %cst_16 = arith.constant 1.000000e-10 : f32
    %35 = vector.broadcast %cst_16 : f32 to vector<2x1xf32>
    %36 = arith.addf %2, %35 : vector<2x1xf32>
    %37 = arith.divf %34, %36 : vector<2x1xf32>
    %cst_17 = arith.constant dense<0.000000e+00> : vector<1xf32>
    %38 = vector.multi_reduction <add>, %37, %cst_17 [0] : vector<2x1xf32> to vector<1xf32>
    %39 = vector.shape_cast %38 : vector<1xf32> to vector<1x1xf32>
    %c255_i32 = arith.constant 255 : i32
    %40 = tpu.dynamic_rotate %20 by %c255_i32 dim 2 : vector<2x11x256xf32>, i32 -> vector<2x11x256xf32>
    %c255_i32_18 = arith.constant 255 : i32
    %41 = tpu.dynamic_rotate %1 by %c255_i32_18 dim 1 : vector<2x256xf32>, i32 -> vector<2x256xf32>
    %42 = tpu.iota {dimensions = array<i32: 1>} : vector<2x256xi32>
    %c255_i32_19 = arith.constant 255 : i32
    %43 = vector.broadcast %c255_i32_19 : i32 to vector<2x256xi32>
    %44 = arith.cmpi slt, %42, %43 : vector<2x256xi32>
    %cst_20 = arith.constant 0.000000e+00 : f32
    %45 = vector.broadcast %cst_20 : f32 to vector<2x256xf32>
    %46 = arith.select %44, %41, %45 : vector<2x256xi1>, vector<2x256xf32>
    %47 = arith.subf %40, %20 : vector<2x11x256xf32>
    %48 = arith.mulf %47, %47 : vector<2x11x256xf32>
    %cst_21 = arith.constant 1.600000e+01 : f32
    %49 = vector.broadcast %cst_21 : f32 to vector<2x11x256xf32>
    %50 = arith.minimumf %48, %49 : vector<2x11x256xf32>
    %51 = vector.shape_cast %46 : vector<2x256xf32> to vector<2x1x256xf32>
    %52 = vector.broadcast %51 : vector<2x1x256xf32> to vector<2x11x256xf32>
    %53 = arith.mulf %50, %52 : vector<2x11x256xf32>
    %cst_22 = arith.constant dense<0.000000e+00> : vector<2x11xf32>
    %54 = vector.multi_reduction <add>, %53, %cst_22 [2] : vector<2x11x256xf32> to vector<2x11xf32>
    %cst_23 = arith.constant dense<0.000000e+00> : vector<2xf32>
    %55 = vector.multi_reduction <add>, %54, %cst_23 [1] : vector<2x11xf32> to vector<2xf32>
    %56 = vector.shape_cast %55 : vector<2xf32> to vector<2x1xf32>
    %cst_24 = arith.constant dense<0.000000e+00> : vector<1xf32>
    %57 = vector.multi_reduction <add>, %56, %cst_24 [0] : vector<2x1xf32> to vector<1xf32>
    %58 = vector.shape_cast %57 : vector<1xf32> to vector<1x1xf32>
    %59 = tpu.iota {dimensions = array<i32: 1>} : vector<1x128xi32>
    %c1_i32 = arith.constant 1 : i32
    %60 = vector.broadcast %c1_i32 : i32 to vector<1x128xi32>
    %61 = arith.cmpi eq, %59, %60 : vector<1x128xi32>
    %cst_25 = arith.constant 0.000000e+00 : f32
    %62 = vector.shape_cast %39 : vector<1x1xf32> to vector<1x1xf32>
    %63 = vector.broadcast %62 : vector<1x1xf32> to vector<1x128xf32>
    %64 = vector.broadcast %cst_25 : f32 to vector<1x128xf32>
    %65 = arith.select %61, %63, %64 : vector<1x128xi1>, vector<1x128xf32>
    %c2_i32 = arith.constant 2 : i32
    %66 = vector.broadcast %c2_i32 : i32 to vector<1x128xi32>
    %67 = arith.cmpi eq, %59, %66 : vector<1x128xi32>
    %cst_26 = arith.constant 0.000000e+00 : f32
    %68 = vector.shape_cast %58 : vector<1x1xf32> to vector<1x1xf32>
    %69 = vector.broadcast %68 : vector<1x1xf32> to vector<1x128xf32>
    %70 = vector.broadcast %cst_26 : f32 to vector<1x128xf32>
    %71 = arith.select %67, %69, %70 : vector<1x128xi1>, vector<1x128xf32>
    %72 = arith.addf %65, %71 : vector<1x128xf32>
    %c0_i32 = arith.constant 0 : i32
    %73 = arith.cmpi eq, %arg2, %c0_i32 : i32
    %74 = arith.extui %73 : i1 to i32
    %c0_i32_27 = arith.constant 0 : i32
    %75 = arith.cmpi ne, %74, %c0_i32_27 : i32
    scf.if %75 {
      %c0_30 = arith.constant 0 : index
      %c0_31 = arith.constant 0 : index
      %c0_32 = arith.constant 0 : index
      %c0_33 = arith.constant 0 : index
      %79 = vector.load %arg9[%c0_30, %c0_31, %c0_32, %c0_33] : memref<1x1x1x128xf32, #tpu.memory_space<vmem>>, vector<1x1x1x128xf32>
      %80 = vector.shape_cast %79 : vector<1x1x1x128xf32> to vector<1x128xf32>
      %81 = vector.shape_cast %72 : vector<1x128xf32> to vector<1x1x1x128xf32>
      tpu.vector_store %arg9[%c0_30, %c0_31, %c0_32, %c0_33], %81 {strides = array<i32>} : memref<1x1x1x128xf32, #tpu.memory_space<vmem>>, vector<1x1x1x128xf32>,
    } else {
    }
    %c0_i32_28 = arith.constant 0 : i32
    %76 = arith.cmpi eq, %arg1, %c0_i32_28 : i32
    %77 = arith.extui %76 : i1 to i32
    %c0_i32_29 = arith.constant 0 : i32
    %78 = arith.cmpi ne, %77, %c0_i32_29 : i32
    scf.if %78 {
      %cst_30 = arith.constant dense<0.000000e+00> : vector<2xf32>
      %79 = vector.multi_reduction <add>, %7, %cst_30 [1] : vector<2x256xf32> to vector<2xf32>
      %80 = vector.shape_cast %79 : vector<2xf32> to vector<2x1xf32>
      %cst_31 = arith.constant dense<0.000000e+00> : vector<1xf32>
      %81 = vector.multi_reduction <add>, %80, %cst_31 [0] : vector<2x1xf32> to vector<1xf32>
      %82 = vector.shape_cast %81 : vector<1xf32> to vector<1x1xf32>
      %c0_32 = arith.constant 0 : index
      %c0_33 = arith.constant 0 : index
      %c0_34 = arith.constant 0 : index
      %c0_35 = arith.constant 0 : index
      %83 = vector.load %arg9[%c0_32, %c0_33, %c0_34, %c0_35] : memref<1x1x1x128xf32, #tpu.memory_space<vmem>>, vector<1x1x1x128xf32>
      %84 = vector.shape_cast %83 : vector<1x1x1x128xf32> to vector<1x128xf32>
      %c3_i32 = arith.constant 3 : i32
      %85 = vector.broadcast %c3_i32 : i32 to vector<1x128xi32>
      %86 = arith.cmpi eq, %59, %85 : vector<1x128xi32>
      %cst_36 = arith.constant 0.000000e+00 : f32
      %87 = vector.shape_cast %82 : vector<1x1xf32> to vector<1x1xf32>
      %88 = vector.broadcast %87 : vector<1x1xf32> to vector<1x128xf32>
      %89 = vector.broadcast %cst_36 : f32 to vector<1x128xf32>
      %90 = arith.select %86, %88, %89 : vector<1x128xi1>, vector<1x128xf32>
      %91 = arith.addf %84, %90 : vector<1x128xf32>
      %c0_37 = arith.constant 0 : index
      %c0_38 = arith.constant 0 : index
      %c0_39 = arith.constant 0 : index
      %c0_40 = arith.constant 0 : index
      %92 = vector.load %arg9[%c0_37, %c0_38, %c0_39, %c0_40] : memref<1x1x1x128xf32, #tpu.memory_space<vmem>>, vector<1x1x1x128xf32>
      %93 = vector.shape_cast %92 : vector<1x1x1x128xf32> to vector<1x128xf32>
      %94 = vector.shape_cast %91 : vector<1x128xf32> to vector<1x1x1x128xf32>
      tpu.vector_store %arg9[%c0_37, %c0_38, %c0_39, %c0_40], %94 {strides = array<i32>} : memref<1x1x1x128xf32, #tpu.memory_space<vmem>>, vector<1x1x1x128xf32>,
      %c0_i32_41 = arith.constant 0 : i32
      %95 = arith.cmpi eq, %arg2, %c0_i32_41 : i32
      %96 = arith.extui %95 : i1 to i32
      %c0_i32_42 = arith.constant 0 : i32
      %97 = arith.cmpi ne, %96, %c0_i32_42 : i32
      scf.if %97 {
        %c0_43 = arith.constant 0 : index
        %c0_44 = arith.constant 0 : index
        %98 = vector.load %arg3[%c0_43, %c0_44] : memref<2x11xf32, #tpu.memory_space<vmem>>, vector<2x11xf32>
        %c0_45 = arith.constant 0 : index
        %c0_46 = arith.constant 0 : index
        %99 = vector.load %arg4[%c0_45, %c0_46] : memref<2x64xi32, #tpu.memory_space<vmem>>, vector<2x64xi32>
        %c-100_i32_47 = arith.constant -100 : i32
        %100 = vector.broadcast %c-100_i32_47 : i32 to vector<2x64xi32>
        %101 = arith.cmpi ne, %99, %100 : vector<2x64xi32>
        %102 = tpu.iota {dimensions = array<i32: 1>} : vector<2x11x64xi32>
        %103 = vector.shape_cast %99 : vector<2x64xi32> to vector<2x1x64xi32>
        %104 = vector.broadcast %103 : vector<2x1x64xi32> to vector<2x11x64xi32>
        %105 = arith.cmpi eq, %104, %102 : vector<2x11x64xi32>
        %106 = vector.shape_cast %101 : vector<2x64xi1> to vector<2x1x64xi1>
        %107 = vector.broadcast %106 : vector<2x1x64xi1> to vector<2x11x64xi1>
        %108 = arith.andi %105, %107 : vector<2x11x64xi1>
        %cst_48 = arith.constant 1.000000e+00 : f32
        %cst_49 = arith.constant 0.000000e+00 : f32
        %109 = vector.broadcast %cst_48 : f32 to vector<2x11x64xf32>
        %110 = vector.broadcast %cst_49 : f32 to vector<2x11x64xf32>
        %111 = arith.select %108, %109, %110 : vector<2x11x64xi1>, vector<2x11x64xf32>
        %cst_50 = arith.constant dense<0.000000e+00> : vector<2x11xf32>
        %112 = vector.multi_reduction <add>, %111, %cst_50 [2] : vector<2x11x64xf32> to vector<2x11xf32>
        %cst_51 = arith.constant 1.562500e-02 : f32
        %113 = vector.broadcast %cst_51 : f32 to vector<2x11xf32>
        %114 = arith.mulf %112, %113 : vector<2x11xf32>
        %cst_52 = arith.constant dense<0.000000e+00> : vector<2xf32>
        %115 = vector.multi_reduction <add>, %114, %cst_52 [1] : vector<2x11xf32> to vector<2xf32>
        %116 = vector.shape_cast %115 : vector<2xf32> to vector<2x1xf32>
        %cst_53 = arith.constant 0.000000e+00 : f32
        %117 = vector.broadcast %cst_53 : f32 to vector<2x1xf32>
        %118 = arith.cmpf ogt, %116, %117 : vector<2x1xf32>
        %cst_54 = arith.constant 1.000000e+00 : f32
        %cst_55 = arith.constant 0.000000e+00 : f32
        %119 = vector.broadcast %cst_54 : f32 to vector<2x1xf32>
        %120 = vector.broadcast %cst_55 : f32 to vector<2x1xf32>
        %121 = arith.select %118, %119, %120 : vector<2x1xi1>, vector<2x1xf32>
        %cst_56 = arith.constant dense<0xFF800000> : vector<2xf32>
        %122 = vector.multi_reduction <maximumf>, %98, %cst_56 [1] : vector<2x11xf32> to vector<2xf32>
        %123 = vector.shape_cast %122 : vector<2xf32> to vector<2x1xf32>
        %124 = vector.broadcast %123 : vector<2x1xf32> to vector<2x11xf32>
        %125 = arith.subf %98, %124 : vector<2x11xf32>
        %126 = math.exp %125 : vector<2x11xf32>
        %cst_57 = arith.constant dense<0.000000e+00> : vector<2xf32>
        %127 = vector.multi_reduction <add>, %126, %cst_57 [1] : vector<2x11xf32> to vector<2xf32>
        %128 = vector.shape_cast %127 : vector<2xf32> to vector<2x1xf32>
        %129 = math.log %128 : vector<2x1xf32>
        %130 = vector.broadcast %129 : vector<2x1xf32> to vector<2x11xf32>
        %131 = arith.subf %125, %130 : vector<2x11xf32>
        %132 = arith.mulf %131, %114 : vector<2x11xf32>
        %cst_58 = arith.constant dense<0.000000e+00> : vector<2xf32>
        %133 = vector.multi_reduction <add>, %132, %cst_58 [1] : vector<2x11xf32> to vector<2xf32>
        %134 = vector.shape_cast %133 : vector<2xf32> to vector<2x1xf32>
        %cst_59 = arith.constant 0.000000e+00 : f32
        %135 = vector.broadcast %cst_59 : f32 to vector<2x1xf32>
        %136 = arith.subf %135, %134 : vector<2x1xf32>
        %137 = arith.mulf %136, %121 : vector<2x1xf32>
        %cst_60 = arith.constant 1.000000e-10 : f32
        %138 = vector.broadcast %cst_60 : f32 to vector<2x1xf32>
        %139 = arith.addf %2, %138 : vector<2x1xf32>
        %140 = arith.divf %137, %139 : vector<2x1xf32>
        %cst_61 = arith.constant dense<0.000000e+00> : vector<1xf32>
        %141 = vector.multi_reduction <add>, %140, %cst_61 [0] : vector<2x1xf32> to vector<1xf32>
        %142 = vector.shape_cast %141 : vector<1xf32> to vector<1x1xf32>
        %c0_62 = arith.constant 0 : index
        %c0_63 = arith.constant 0 : index
        %c0_64 = arith.constant 0 : index
        %c0_65 = arith.constant 0 : index
        %143 = vector.load %arg9[%c0_62, %c0_63, %c0_64, %c0_65] : memref<1x1x1x128xf32, #tpu.memory_space<vmem>>, vector<1x1x1x128xf32>
        %144 = vector.shape_cast %143 : vector<1x1x1x128xf32> to vector<1x128xf32>
        %c0_i32_66 = arith.constant 0 : i32
        %145 = vector.broadcast %c0_i32_66 : i32 to vector<1x128xi32>
        %146 = arith.cmpi eq, %59, %145 : vector<1x128xi32>
        %cst_67 = arith.constant 0.000000e+00 : f32
        %147 = vector.shape_cast %142 : vector<1x1xf32> to vector<1x1xf32>
        %148 = vector.broadcast %147 : vector<1x1xf32> to vector<1x128xf32>
        %149 = vector.broadcast %cst_67 : f32 to vector<1x128xf32>
        %150 = arith.select %146, %148, %149 : vector<1x128xi1>, vector<1x128xf32>
        %151 = arith.addf %144, %150 : vector<1x128xf32>
        %c0_68 = arith.constant 0 : index
        %c0_69 = arith.constant 0 : index
        %c0_70 = arith.constant 0 : index
        %c0_71 = arith.constant 0 : index
        %152 = vector.load %arg9[%c0_68, %c0_69, %c0_70, %c0_71] : memref<1x1x1x128xf32, #tpu.memory_space<vmem>>, vector<1x1x1x128xf32>
        %153 = vector.shape_cast %152 : vector<1x1x1x128xf32> to vector<1x128xf32>
        %154 = vector.shape_cast %151 : vector<1x128xf32> to vector<1x1x1x128xf32>
        tpu.vector_store %arg9[%c0_68, %c0_69, %c0_70, %c0_71], %154 {strides = array<i32>} : memref<1x1x1x128xf32, #tpu.memory_space<vmem>>, vector<1x1x1x128xf32>,
      } else {
      }
    } else {
    }
    return
  }
  func.func @transform_0(%arg0: i32, %arg1: i32, %arg2: i32) -> (i32, i32) {
    %c0_i32 = arith.constant 0 : i32
    %c0_i32_0 = arith.constant 0 : i32
    return %arg0, %c0_i32 : i32, i32
  }
  func.func @transform_1(%arg0: i32, %arg1: i32, %arg2: i32) -> (i32, i32) {
    %c0_i32 = arith.constant 0 : i32
    %c0_i32_0 = arith.constant 0 : i32
    return %arg0, %c0_i32 : i32, i32
  }
  func.func @transform_2(%arg0: i32, %arg1: i32, %arg2: i32) -> (i32, i32) {
    %c0_i32 = arith.constant 0 : i32
    %c0_i32_0 = arith.constant 0 : i32
    return %arg0, %c0_i32 : i32, i32
  }
  func.func @transform_3(%arg0: i32, %arg1: i32, %arg2: i32) -> (i32, i32, i32, i32) {
    %c0_i32 = arith.constant 0 : i32
    %c0_i32_0 = arith.constant 0 : i32
    return %arg1, %arg0, %c0_i32, %arg2 : i32, i32, i32, i32
  }
  func.func @transform_4(%arg0: i32, %arg1: i32, %arg2: i32) -> (i32, i32) {
    %c0_i32 = arith.constant 0 : i32
    return %arg0, %arg2 : i32, i32
  }
  func.func @transform_5(%arg0: i32, %arg1: i32, %arg2: i32) -> (i32, i32) {
    %c0_i32 = arith.constant 0 : i32
    return %arg0, %arg2 : i32, i32
  }
  func.func @transform_6(%arg0: i32, %arg1: i32, %arg2: i32) -> (i32, i32, i32, i32) {
    %c0_i32 = arith.constant 0 : i32
    %c0_i32_0 = arith.constant 0 : i32
    %c0_i32_1 = arith.constant 0 : i32
    return %arg0, %arg1, %c0_i32, %c0_i32_0 : i32, i32, i32, i32
  }
}

</mosaic_0001>

<llo_original>
// kernel: tpu_custom_call.1
$region0: #{tpu_custom_call.1}
  #allocation0 [shape = 'u32[]', space=smem, size = 0x4, offset = 0x4, fixed_abs, tag = 'smem constant byte address 0x4 - core index']
  #allocation1 [shape = 'u32[72,128]{1,0:T(1,128)}', space=vmem, size = 0x9000, scoped, tag = 'internal scratch']
  #allocation2 [shape = 'f32[2,11]{1,0:T(2,128)}', space=vmem, size = 0x400, scoped, tag = 'scratch operand']
  %s0 = inlined_call_operand.vmem [shape: f32[2,11], index: 0, kind: input, shape index: {}]
  %s1 = inlined_call_operand.vmem [shape: s32[2,64], index: 1, kind: input, shape index: {}]
  %s2 = inlined_call_operand.vmem [shape: f32[2,1], index: 2, kind: input, shape index: {}]
  %s3 = inlined_call_operand.vmem [shape: bf16[4,2,11,256], index: 3, kind: input, shape index: {}]
  %s4 = inlined_call_operand.vmem [shape: s32[2,256], index: 4, kind: input, shape index: {}]
  %s5 = inlined_call_operand.vmem [shape: f32[2,256], index: 5, kind: input, shape index: {}]
  %s6 = inlined_call_operand.hbm [shape: f32[1,4,1,128], index: 6, kind: output, shape index: {}]
  %s7 = sld [smem:[#allocation0]]
  $region69: #{tpu_custom_call.1} parent=0
    _
  %s9 = ssub.s32 1, %s7
  %s10 = scalar_select 0, %s9, %s7
  $region1: #{tpu_custom_call.1} parent=0
    #allocation3 [shape = 'u8[1024]{0}', space=vmem, size = 0x400, scoped, tag = 'output window, operand 0']
    #allocation4 [shape = 's32[2]{0}', space=sflag, size = 0x8, scoped, tag = 'scoped memory for tpu_custom_call.1']
    %11 = vsyncpa [#allocation4], 0
    %s12 = scalar_lea.sflag [#allocation4], 1
    %13 = vsyncpa %s12, 0
    loop: start=0, step=1, limit=6
    $region2: #{tpu_custom_call.1} parent=1 // loop_pre_header
      _
    $region3: #{tpu_custom_call.1} parent=1 // loop_header
      %s15 = sphi 0, %s19
      %p16 = scmp.ge.s32.totalorder %s15, 6
      %s22 = sphi 0, %s41
      %s23 = sphi 0, %s37
      %s24 = sphi 0, %s33
      %s25 = sphi 0, %s22
      %s26 = sphi 0, %s23
      %s27 = sphi 0, %s24
      %s28 = sphi 0, %s25
      %s29 = sphi 0, %s26
      %s30 = sphi 0, %s27
      %s44 = sphi 0, %s46
      %s47 = sphi 0, %s44
      %s48 = sphi 0, %s47
      %s64 = sphi 0, %s48
      %s70 = sphi 0, %s72
      %s73 = sphi 0, %s70
      %s74 = sphi 0, %s73
      %s90 = sphi 0, %s74
      %s96 = sphi 0, %s98
      %s99 = sphi 0, %s96
      %s100 = sphi 0, %s99
      %s116 = sphi 0, %s100
      %s126 = sphi 0, %s128
      %s129 = sphi 0, %s126
      %s130 = sphi 0, %s129
      %s146 = sphi 0, %s130
      %s154 = sphi 0, %s156
      %s157 = sphi 0, %s154
      %s158 = sphi 0, %s157
      %s174 = sphi 0, %s158
      %s182 = sphi 0, %s184
      %s185 = sphi 0, %s182
      %s186 = sphi 0, %s185
      %s202 = sphi 0, %s186
      %s210 = sphi 0, %s212
      %s213 = sphi 0, %s210
      %s214 = sphi 0, %s213
      %s230 = sphi 0, %s214
    $region4: #{tpu_custom_call.1} parent=1 // loop_header_branch
      %18 = sbr.rel (%p16) target = $region8
    $region5: #{tpu_custom_call.1} parent=1 // loop_body
      %s20 = ssub.s32 %s15, 1
      %s21 = ssub.s32 %s15, 2
      %s31 = sadd.s32 1, %s24
      %p32 = scmp.ge.s32.totalorder %s31, 1
      %s33 = scalar_select %p32, 0, %s31
      %s34 = sadd.s32 1, %s23
      %s35 = scalar_select %p32, %s34, %s23
      %p36 = scmp.ge.s32.totalorder %s35, 4
      %s37 = scalar_select %p36, 0, %s35
      %s38 = sadd.s32 1, %s22
      %s39 = scalar_select %p36, %s38, %s22
      %p40 = scmp.ge.s32.totalorder %s39, 1
      %s41 = scalar_select %p40, 0, %s39
      %s42 = ssub.s32 %s22, %s41
      %p43 = scmp.eq.s32.totalorder %s42, 0
      %s45 = sadd.s32 %s44, 1
      %s46 = scalar_select %p43, %s44, %s45
      %p49 = pneg %p43
      %p50 = scmp.eq.s32.totalorder %s15, 3
      %p51 = por %p49, %p50
      %p52 = scmp.ne.s32.totalorder %s44, %s47
      %p53 = scmp.eq.s32.totalorder %s15, 0
      %p54 = por %p52, %p53
      %p55 = scmp.ne.s32.totalorder %s44, %s47
      %p56 = scmp.eq.s32.totalorder %s20, 3
      %p57 = por %p55, %p56
      %p58 = scmp.ne.s32.totalorder %s47, %s48
      %p59 = scmp.eq.s32.totalorder %s20, 0
      %p60 = por %p58, %p59
      %p61 = scmp.ne.s32.totalorder %s47, %s48
      %p62 = scmp.eq.s32.totalorder %s21, 3
      %p63 = por %p61, %p62
      %p65 = scmp.ne.s32.totalorder %s48, %s64
      %p66 = scmp.eq.s32.totalorder %s21, 0
      %p67 = por %p65, %p66
      %s68 = ssub.s32 %s22, %s41
      %p69 = scmp.eq.s32.totalorder %s68, 0
      %s71 = sadd.s32 %s70, 1
      %s72 = scalar_select %p69, %s70, %s71
      %p75 = pneg %p69
      %p76 = scmp.eq.s32.totalorder %s15, 3
      %p77 = por %p75, %p76
      %p78 = scmp.ne.s32.totalorder %s70, %s73
      %p79 = scmp.eq.s32.totalorder %s15, 0
      %p80 = por %p78, %p79
      %p81 = scmp.ne.s32.totalorder %s70, %s73
      %p82 = scmp.eq.s32.totalorder %s20, 3
      %p83 = por %p81, %p82
      %p84 = scmp.ne.s32.totalorder %s73, %s74
      %p85 = scmp.eq.s32.totalorder %s20, 0
      %p86 = por %p84, %p85
      %p87 = scmp.ne.s32.totalorder %s73, %s74
      %p88 = scmp.eq.s32.totalorder %s21, 3
      %p89 = por %p87, %p88
      %p91 = scmp.ne.s32.totalorder %s74, %s90
      %p92 = scmp.eq.s32.totalorder %s21, 0
      %p93 = por %p91, %p92
      %s94 = ssub.s32 %s22, %s41
      %p95 = scmp.eq.s32.totalorder %s94, 0
      %s97 = sadd.s32 %s96, 1
      %s98 = scalar_select %p95, %s96, %s97
      %p101 = pneg %p95
      %p102 = scmp.eq.s32.totalorder %s15, 3
      %p103 = por %p101, %p102
      %p104 = scmp.ne.s32.totalorder %s96, %s99
      %p105 = scmp.eq.s32.totalorder %s15, 0
      %p106 = por %p104, %p105
      %p107 = scmp.ne.s32.totalorder %s96, %s99
      %p108 = scmp.eq.s32.totalorder %s20, 3
      %p109 = por %p107, %p108
      %p110 = scmp.ne.s32.totalorder %s99, %s100
      %p111 = scmp.eq.s32.totalorder %s20, 0
      %p112 = por %p110, %p111
      %p113 = scmp.ne.s32.totalorder %s99, %s100
      %p114 = scmp.eq.s32.totalorder %s21, 3
      %p115 = por %p113, %p114
      %p117 = scmp.ne.s32.totalorder %s100, %s116
      %p118 = scmp.eq.s32.totalorder %s21, 0
      %p119 = por %p117, %p118
      %s120 = ssub.s32 %s23, %s37
      %s121 = ssub.s32 %s22, %s41
      %s122 = sor.u32 %s120, %s121
      %s123 = ssub.s32 %s24, %s33
      %s124 = sor.u32 %s122, %s123
      %p125 = scmp.eq.s32.totalorder %s124, 0
      %s127 = sadd.s32 %s126, 1
      %s128 = scalar_select %p125, %s126, %s127
      %p131 = pneg %p125
      %p132 = scmp.eq.s32.totalorder %s15, 3
      %p133 = por %p131, %p132
      %p134 = scmp.ne.s32.totalorder %s126, %s129
      %p135 = scmp.eq.s32.totalorder %s15, 0
      %p136 = por %p134, %p135
      %p137 = scmp.ne.s32.totalorder %s126, %s129
      %p138 = scmp.eq.s32.totalorder %s20, 3
      %p139 = por %p137, %p138
      %p140 = scmp.ne.s32.totalorder %s129, %s130
      %p141 = scmp.eq.s32.totalorder %s20, 0
      %p142 = por %p140, %p141
      %p143 = scmp.ne.s32.totalorder %s129, %s130
      %p144 = scmp.eq.s32.totalorder %s21, 3
      %p145 = por %p143, %p144
      %p147 = scmp.ne.s32.totalorder %s130, %s146
      %p148 = scmp.eq.s32.totalorder %s21, 0
      %p149 = por %p147, %p148
      %s150 = ssub.s32 %s22, %s41
      %s151 = ssub.s32 %s24, %s33
      %s152 = sor.u32 %s150, %s151
      %p153 = scmp.eq.s32.totalorder %s152, 0
      %s155 = sadd.s32 %s154, 1
      %s156 = scalar_select %p153, %s154, %s155
      %p159 = pneg %p153
      %p160 = scmp.eq.s32.totalorder %s15, 3
      %p161 = por %p159, %p160
      %p162 = scmp.ne.s32.totalorder %s154, %s157
      %p163 = scmp.eq.s32.totalorder %s15, 0
      %p164 = por %p162, %p163
      %p165 = scmp.ne.s32.totalorder %s154, %s157
      %p166 = scmp.eq.s32.totalorder %s20, 3
      %p167 = por %p165, %p166
      %p168 = scmp.ne.s32.totalorder %s157, %s158
      %p169 = scmp.eq.s32.totalorder %s20, 0
      %p170 = por %p168, %p169
      %p171 = scmp.ne.s32.totalorder %s157, %s158
      %p172 = scmp.eq.s32.totalorder %s21, 3
      %p173 = por %p171, %p172
      %p175 = scmp.ne.s32.totalorder %s158, %s174
      %p176 = scmp.eq.s32.totalorder %s21, 0
      %p177 = por %p175, %p176
      %s178 = ssub.s32 %s22, %s41
      %s179 = ssub.s32 %s24, %s33
      %s180 = sor.u32 %s178, %s179
      %p181 = scmp.eq.s32.totalorder %s180, 0
      %s183 = sadd.s32 %s182, 1
      %s184 = scalar_select %p181, %s182, %s183
      %p187 = pneg %p181
      %p188 = scmp.eq.s32.totalorder %s15, 3
      %p189 = por %p187, %p188
      %p190 = scmp.ne.s32.totalorder %s182, %s185
      %p191 = scmp.eq.s32.totalorder %s15, 0
      %p192 = por %p190, %p191
      %p193 = scmp.ne.s32.totalorder %s182, %s185
      %p194 = scmp.eq.s32.totalorder %s20, 3
      %p195 = por %p193, %p194
      %p196 = scmp.ne.s32.totalorder %s185, %s186
      %p197 = scmp.eq.s32.totalorder %s20, 0
      %p198 = por %p196, %p197
      %p199 = scmp.ne.s32.totalorder %s185, %s186
      %p200 = scmp.eq.s32.totalorder %s21, 3
      %p201 = por %p199, %p200
      %p203 = scmp.ne.s32.totalorder %s186, %s202
      %p204 = scmp.eq.s32.totalorder %s21, 0
      %p205 = por %p203, %p204
      %s206 = ssub.s32 %s22, %s41
      %s207 = ssub.s32 %s23, %s37
      %s208 = sor.u32 %s206, %s207
      %p209 = scmp.eq.s32.totalorder %s208, 0
      %s211 = sadd.s32 %s210, 1
      %s212 = scalar_select %p209, %s210, %s211
      %p215 = pneg %p209
      %p216 = scmp.eq.s32.totalorder %s15, 3
      %p217 = por %p215, %p216
      %p218 = scmp.ne.s32.totalorder %s210, %s213
      %p219 = scmp.eq.s32.totalorder %s15, 0
      %p220 = por %p218, %p219
      %p221 = scmp.ne.s32.totalorder %s210, %s213
      %p222 = scmp.eq.s32.totalorder %s20, 3
      %p223 = por %p221, %p222
      %p224 = scmp.ne.s32.totalorder %s213, %s214
      %p225 = scmp.eq.s32.totalorder %s20, 0
      %p226 = por %p224, %p225
      %p227 = scmp.ne.s32.totalorder %s213, %s214
      %p228 = scmp.eq.s32.totalorder %s21, 3
      %p229 = por %p227, %p228
      %p231 = scmp.ne.s32.totalorder %s214, %s230
      %p232 = scmp.eq.s32.totalorder %s21, 0
      %p233 = por %p231, %p232
      %p234 = scmp.le.s32.totalorder 1, %s15
      %p235 = scmp.lt.s32.totalorder %s15, 5
      %p236 = pnand %p234, %p235
      %p237 = pneg %p236
      // Predicated region
      $region9: #{tpu_custom_call.1} parent=5 // pred_check
        _
      $region10: #{tpu_custom_call.1} parent=5 // pred_check_branch
        %239 = sbr.rel (%p236) target = $region12
      $region11: #{tpu_custom_call.1} parent=5 // pred_region
        %s240 = ssub.s32 %s15, 1
        // Predicated region
        $region13: #{tpu_custom_call.1} parent=11 // pred_check
          %p241 = pneg %p60
        $region14: #{tpu_custom_call.1} parent=11 // pred_check_branch
          %243 = sbr.rel (%p241) target = $region16
        $region15: #{tpu_custom_call.1} parent=11 // pred_region
          %p244 = scmp.lt.s32.totalorder %s25, 0
          %s245 = scalar_select %p244, %s25, 0
          %s246 = smul.addr %s245, 2
          %s247 = scalar_lea.vmem %s0, %s246
        $region16: #{tpu_custom_call.1} parent=11 // pred_fallthru
          _
        // Predicated region
        $region17: #{tpu_custom_call.1} parent=11 // pred_check
          %p248 = pneg %p86
        $region18: #{tpu_custom_call.1} parent=11 // pred_check_branch
          %250 = sbr.rel (%p248) target = $region20
        $region19: #{tpu_custom_call.1} parent=11 // pred_region
          %p251 = scmp.lt.s32.totalorder %s25, 0
          %s252 = scalar_select %p251, %s25, 0
          %s253 = smul.addr %s252, 2
          %s254 = scalar_lea.vmem %s1, %s253
        $region20: #{tpu_custom_call.1} parent=11 // pred_fallthru
          _
        // Predicated region
        $region21: #{tpu_custom_call.1} parent=11 // pred_check
          %p255 = pneg %p112
        $region22: #{tpu_custom_call.1} parent=11 // pred_check_branch
          %257 = sbr.rel (%p255) target = $region24
        $region23: #{tpu_custom_call.1} parent=11 // pred_region
          %p258 = scmp.lt.s32.totalorder %s25, 0
          %s259 = scalar_select %p258, %s25, 0
          %s260 = smul.addr %s259, 2
          %s261 = scalar_lea.vmem %s2, %s260
        $region24: #{tpu_custom_call.1} parent=11 // pred_fallthru
          _
        // Predicated region
        $region25: #{tpu_custom_call.1} parent=11 // pred_check
          %p262 = pneg %p170
        $region26: #{tpu_custom_call.1} parent=11 // pred_check_branch
          %264 = sbr.rel (%p262) target = $region28
        $region27: #{tpu_custom_call.1} parent=11 // pred_region
          %s265 = smul.u32 2, %s27
          %p266 = scmp.lt.s32.totalorder %s25, 0
          %s267 = scalar_select %p266, %s25, 0
          %p268 = scmp.lt.s32.totalorder %s265, 1
          %s269 = scalar_select %p268, %s265, 1
          %s270 = smul.addr %s267, 2
          %s271 = sadd.s32 %s269, %s270
          %s272 = smul.addr %s271, 2
          %s273 = scalar_lea.vmem %s4, %s272
          %s274 = smul.u32 2, %s27
        $region28: #{tpu_custom_call.1} parent=11 // pred_fallthru
          _
        // Predicated region
        $region29: #{tpu_custom_call.1} parent=11 // pred_check
          %p275 = pneg %p198
        $region30: #{tpu_custom_call.1} parent=11 // pred_check_branch
          %277 = sbr.rel (%p275) target = $region32
        $region31: #{tpu_custom_call.1} parent=11 // pred_region
          %s278 = smul.u32 2, %s27
          %p279 = scmp.lt.s32.totalorder %s25, 0
          %s280 = scalar_select %p279, %s25, 0
          %p281 = scmp.lt.s32.totalorder %s278, 1
          %s282 = scalar_select %p281, %s278, 1
          %s283 = smul.addr %s280, 2
          %s284 = sadd.s32 %s282, %s283
          %s285 = smul.addr %s284, 2
          %s286 = scalar_lea.vmem %s5, %s285
          %s287 = smul.u32 2, %s27
        $region32: #{tpu_custom_call.1} parent=11 // pred_fallthru
          _
      $region12: #{tpu_custom_call.1} parent=5 // pred_fallthru
        _
      %p288 = scmp.lt.s32.totalorder %s15, 4
      // Predicated region
      $region33: #{tpu_custom_call.1} parent=5 // pred_check
        %p289 = pneg %p288
      $region34: #{tpu_custom_call.1} parent=5 // pred_check_branch
        %291 = sbr.rel (%p289) target = $region36
      $region35: #{tpu_custom_call.1} parent=5 // pred_region
        // Predicated region
        $region37: #{tpu_custom_call.1} parent=35 // pred_check
          %p292 = pneg %p136
        $region38: #{tpu_custom_call.1} parent=35 // pred_check_branch
          %294 = sbr.rel (%p292) target = $region40
        $region39: #{tpu_custom_call.1} parent=35 // pred_region
          %s295 = smul.u32 2, %s22
          %s296 = smul.u32 2, %s24
          %p297 = scmp.lt.s32.totalorder %s23, 3
          %s298 = scalar_select %p297, %s23, 3
          %p299 = scmp.lt.s32.totalorder %s295, 1
          %s300 = scalar_select %p299, %s295, 1
          %p301 = scmp.lt.s32.totalorder %s296, 1
          %s302 = scalar_select %p301, %s296, 1
          %s303 = smul.addr %s300, 4
          %s304 = sadd.s32 %s302, %s303
          %s305 = smul.addr %s298, 8
          %s306 = sadd.s32 %s304, %s305
          %s307 = smul.addr %s306, 4
          %s308 = scalar_lea.vmem %s3, %s307
          %s309 = smul.u32 2, %s22
          %s310 = smul.u32 2, %s24
        $region40: #{tpu_custom_call.1} parent=35 // pred_fallthru
          _
      $region36: #{tpu_custom_call.1} parent=5 // pred_fallthru
        _
      %p311 = scmp.le.s32.totalorder 1, %s15
      %p312 = scmp.lt.s32.totalorder %s15, 5
      %p313 = pnand %p311, %p312
      %p314 = pneg %p313
      // Predicated region
      $region41: #{tpu_custom_call.1} parent=5 // pred_check
        _
      $region42: #{tpu_custom_call.1} parent=5 // pred_check_branch
        %316 = sbr.rel (%p313) target = $region44
      $region43: #{tpu_custom_call.1} parent=5 // pred_region
        %s317 = ssub.s32 %s15, 1
        %p318 = scmp.lt.s32.totalorder %s25, 0
        %s319 = scalar_select %p318, %s25, 0
        %s320 = smul.addr %s319, 2
        %s321 = scalar_lea.vmem %s0, %s320
        %p322 = pneg %p60
        %p323 = pneg %p57
        %p324 = scmp.lt.s32.totalorder %s25, 0
        %s325 = scalar_select %p324, %s25, 0
        %s326 = smul.addr %s325, 2
        %s327 = scalar_lea.vmem %s1, %s326
        %p328 = pneg %p86
        %p329 = pneg %p83
        %p330 = scmp.lt.s32.totalorder %s25, 0
        %s331 = scalar_select %p330, %s25, 0
        %s332 = smul.addr %s331, 2
        %s333 = scalar_lea.vmem %s2, %s332
        %p334 = pneg %p112
        %p335 = pneg %p109
        %s336 = smul.u32 2, %s25
        %s337 = smul.u32 2, %s27
        %p338 = scmp.lt.s32.totalorder %s26, 3
        %s339 = scalar_select %p338, %s26, 3
        %p340 = scmp.lt.s32.totalorder %s336, 1
        %s341 = scalar_select %p340, %s336, 1
        %p342 = scmp.lt.s32.totalorder %s337, 1
        %s343 = scalar_select %p342, %s337, 1
        %s344 = smul.addr %s341, 4
        %s345 = sadd.s32 %s343, %s344
        %s346 = smul.addr %s339, 8
        %s347 = sadd.s32 %s345, %s346
        %s348 = smul.addr %s347, 4
        %s349 = scalar_lea.vmem %s3, %s348
        %p350 = pneg %p142
        %p351 = pneg %p139
        %s352 = smul.u32 2, %s27
        %p353 = scmp.lt.s32.totalorder %s25, 0
        %s354 = scalar_select %p353, %s25, 0
        %p355 = scmp.lt.s32.totalorder %s352, 1
        %s356 = scalar_select %p355, %s352, 1
        %s357 = smul.addr %s354, 2
        %s358 = sadd.s32 %s356, %s357
        %s359 = smul.addr %s358, 2
        %s360 = scalar_lea.vmem %s4, %s359
        %p361 = pneg %p170
        %p362 = pneg %p167
        %s363 = smul.u32 2, %s27
        %p364 = scmp.lt.s32.totalorder %s25, 0
        %s365 = scalar_select %p364, %s25, 0
        %p366 = scmp.lt.s32.totalorder %s363, 1
        %s367 = scalar_select %p366, %s363, 1
        %s368 = smul.addr %s365, 2
        %s369 = sadd.s32 %s367, %s368
        %s370 = smul.addr %s369, 2
        %s371 = scalar_lea.vmem %s5, %s370
        %p372 = pneg %p198
        %p373 = pneg %p195
        %p374 = pneg %p226
        %p375 = pneg %p223
        %s376 = sand.u32 %s213, 1
        %s377 = scalar_lea.sflag [#allocation4], %s376
        %s378 = sand.u32 %s213, 1
        %s379 = scalar_lea.vmem [#allocation3], %s378
        %p380 = scmp.lt.s32.totalorder %s25, 0
        %s381 = scalar_select %p380, %s25, 0
        %s382 = smul.addr %s381, 2
        %s383 = scalar_lea.vmem %s0, %s382
        %p384 = scmp.lt.s32.totalorder %s25, 0
        %s385 = scalar_select %p384, %s25, 0
        %s386 = smul.addr %s385, 2
        %s387 = scalar_lea.vmem %s1, %s386
        %p388 = scmp.lt.s32.totalorder %s25, 0
        %s389 = scalar_select %p388, %s25, 0
        %s390 = smul.addr %s389, 2
        %s391 = scalar_lea.vmem %s2, %s390
        %s392 = smul.u32 2, %s25
        %s393 = smul.u32 2, %s27
        %p394 = scmp.lt.s32.totalorder %s26, 3
        %s395 = scalar_select %p394, %s26, 3
        %p396 = scmp.lt.s32.totalorder %s392, 1
        %s397 = scalar_select %p396, %s392, 1
        %p398 = scmp.lt.s32.totalorder %s393, 1
        %s399 = scalar_select %p398, %s393, 1
        %s400 = smul.addr %s397, 4
        %s401 = sadd.s32 %s399, %s400
        %s402 = smul.addr %s395, 8
        %s403 = sadd.s32 %s401, %s402
        %s404 = smul.addr %s403, 4
        %s405 = scalar_lea.vmem %s3, %s404
        %s406 = smul.u32 2, %s25
        %s407 = smul.u32 2, %s27
        %s408 = smul.u32 2, %s27
        %p409 = scmp.lt.s32.totalorder %s25, 0
        %s410 = scalar_select %p409, %s25, 0
        %p411 = scmp.lt.s32.totalorder %s408, 1
        %s412 = scalar_select %p411, %s408, 1
        %s413 = smul.addr %s410, 2
        %s414 = sadd.s32 %s412, %s413
        %s415 = smul.addr %s414, 2
        %s416 = scalar_lea.vmem %s4, %s415
        %s417 = smul.u32 2, %s27
        %s418 = smul.u32 2, %s27
        %p419 = scmp.lt.s32.totalorder %s25, 0
        %s420 = scalar_select %p419, %s25, 0
        %p421 = scmp.lt.s32.totalorder %s418, 1
        %s422 = scalar_select %p421, %s418, 1
        %s423 = smul.addr %s420, 2
        %s424 = sadd.s32 %s422, %s423
        %s425 = smul.addr %s424, 2
        %s426 = scalar_lea.vmem %s5, %s425
        %s427 = smul.u32 2, %s27
        %v428 = vld [vmem:[%s416] sm:$0xf]
        %v429 = vld [vmem:[%s426] sm:$0xf]
        %v430 = vld [vmem:[%s391] sm:$0x3]
        %vm431 = vcmp.ne.s32.totalorder %v428, 4294967196
        %v432 = vsel %vm431, 1.0, 0.0
        %v433 = vld [vmem:[%s405] sm:$0xff]
        %v434 = vld [vmem:[%s405 + $0x8] sm:$0x33]
        %v435 = vld [vmem:[%s405 + $0x10] sm:$0xff]
        %v436 = vld [vmem:[%s405 + $0x18] sm:$0x33]
        %v437 = vunpack.c.l.bf16 %v433
        %v438 = vunpack.c.h.bf16 %v433
        %v439 = vunpack.c.l.bf16 %v434
        %v440 = vunpack.c.h.bf16 %v434
        %v441 = vunpack.c.l.bf16 %v435
        %v442 = vunpack.c.h.bf16 %v435
        %v443 = vunpack.c.l.bf16 %v436
        %v444 = vunpack.c.h.bf16 %v436
        %vm445 = vcmask 1042432
        %v446 = vsel %vm445, %v439, -inf
        %v447 = vmax.f32 %v437, %v446
        %v448 = vrot.slane %v447, 4
        %v449 = vmax.f32 %v447, %v448
        %v450 = vrot.slane %v449, 2
        %v451 = vmax.f32 %v449, %v450
        %v452 = vrot.slane %v451, 1
        %v453 = vmax.f32 %v451, %v452
        %v454 = vsel %vm445, %v440, -inf
        %v455 = vmax.f32 %v438, %v454
        %v456 = vrot.slane %v455, 4
        %v457 = vmax.f32 %v455, %v456
        %v458 = vrot.slane %v457, 2
        %v459 = vmax.f32 %v457, %v458
        %v460 = vrot.slane %v459, 1
        %v461 = vmax.f32 %v459, %v460
        %v462 = vsel %vm445, %v443, -inf
        %v463 = vmax.f32 %v441, %v462
        %v464 = vrot.slane %v463, 4
        %v465 = vmax.f32 %v463, %v464
        %v466 = vrot.slane %v465, 2
        %v467 = vmax.f32 %v465, %v466
        %v468 = vrot.slane %v467, 1
        %v469 = vmax.f32 %v467, %v468
        %v470 = vsel %vm445, %v444, -inf
        %v471 = vmax.f32 %v442, %v470
        %v472 = vrot.slane %v471, 4
        %v473 = vmax.f32 %v471, %v472
        %v474 = vrot.slane %v473, 2
        %v475 = vmax.f32 %v473, %v474
        %v476 = vrot.slane %v475, 1
        %v477 = vmax.f32 %v475, %v476
        %v478 = vsub.f32 %v437, %v453
        %v479 = vsub.f32 %v438, %v461
        %v480 = vsub.f32 %v439, %v453
        %v481 = vsub.f32 %v440, %v461
        %v482 = vsub.f32 %v441, %v469
        %v483 = vsub.f32 %v442, %v477
        %v484 = vsub.f32 %v443, %v469
        %v485 = vsub.f32 %v444, %v477
        %v486 = vmul.f32 %v478, 1.442695
        %v487 = vpow.pop %v486
        %v488 = vmul.f32 %v479, 1.442695
        %v489 = vpow.pop %v488
        %v490 = vmul.f32 %v480, 1.442695
        %v491 = vpow.pop %v490
        %v492 = vmul.f32 %v481, 1.442695
        %v493 = vpow.pop %v492
        %v494 = vmul.f32 %v482, 1.442695
        %v495 = vpow.pop %v494
        %v496 = vmul.f32 %v483, 1.442695
        %v497 = vpow.pop %v496
        %v498 = vmul.f32 %v484, 1.442695
        %v499 = vpow.pop %v498
        %v500 = vmul.f32 %v485, 1.442695
        %v501 = vpow.pop %v500
        %v502 = vsel %vm445, %v491, 0.0
        %v503 = vadd.f32 %v487, %v502
        %v504 = vrot.slane %v503, 4
        %v505 = vadd.f32 %v503, %v504
        %v506 = vrot.slane %v505, 2
        %v507 = vadd.f32 %v505, %v506
        %v508 = vrot.slane %v507, 1
        %v509 = vadd.f32 %v507, %v508
        %v510 = vsel %vm445, %v493, 0.0
        %v511 = vadd.f32 %v489, %v510
        %v512 = vrot.slane %v511, 4
        %v513 = vadd.f32 %v511, %v512
        %v514 = vrot.slane %v513, 2
        %v515 = vadd.f32 %v513, %v514
        %v516 = vrot.slane %v515, 1
        %v517 = vadd.f32 %v515, %v516
        %v518 = vsel %vm445, %v499, 0.0
        %v519 = vadd.f32 %v495, %v518
        %v520 = vrot.slane %v519, 4
        %v521 = vadd.f32 %v519, %v520
        %v522 = vrot.slane %v521, 2
        %v523 = vadd.f32 %v521, %v522
        %v524 = vrot.slane %v523, 1
        %v525 = vadd.f32 %v523, %v524
        %v526 = vsel %vm445, %v501, 0.0
        %v527 = vadd.f32 %v497, %v526
        %v528 = vrot.slane %v527, 4
        %v529 = vadd.f32 %v527, %v528
        %v530 = vrot.slane %v529, 2
        %v531 = vadd.f32 %v529, %v530
        %v532 = vrot.slane %v531, 1
        %v533 = vadd.f32 %v531, %v532
        %v534 = vlog2.pop %v509
        %v535 = vmul.f32 %v534, 0.6931472
        %v536 = vlog2.pop %v517
        %v537 = vmul.f32 %v536, 0.6931472
        %v538 = vlog2.pop %v525
        %v539 = vmul.f32 %v538, 0.6931472
        %v540 = vlog2.pop %v533
        %v541 = vmul.f32 %v540, 0.6931472
        %v542 = vsub.f32 %v478, %v535
        %v543 = vsub.f32 %v479, %v537
        %v544 = vsub.f32 %v480, %v535
        %v545 = vsub.f32 %v481, %v537
        %v546 = vsub.f32 %v482, %v539
        %v547 = vsub.f32 %v483, %v541
        %v548 = vsub.f32 %v484, %v539
        %v549 = vsub.f32 %v485, %v541
        %v550 = vlaneseq
        %v551 = vshrl.u32 %v550, 7
        %v552 = vadd.s32 %v551, 8
        %v553 = vrot.slane %v428, 1
        %v554 = vrot.slane %v428, 2
        %v555 = vrot.slane %v428, 3
        %vm556 = vcmask 1040384
        %v557 = vsel %vm556, %v428, %v553
        %vm558 = vcmask 1042434
        %v559 = vsel %vm558, %v554, %v555
        %vm560 = vcmask 1041408
        %v561 = vsel %vm560, %v557, %v559
        %vm562 = vcmask 1041409
        %v563 = vsel %vm562, %v428, %v553
        %vm564 = vcmask 1043459
        %v565 = vsel %vm564, %v554, %v555
        %vm566 = vcmask 1042433
        %v567 = vsel %vm566, %v563, %v565
        %v568 = vrot.slane %v567, 1
        %v569 = vperm.slane %v561, 0
        %v570 = vperm.slane %v561, 1
        %v571 = vperm.slane %v568, 0
        %v572 = vperm.slane %v568, 1
        %vm573 = vcmp.eq.s32.totalorder %v569, %v551
        %vm574 = vcmp.eq.s32.totalorder %v570, %v551
        %vm575 = vcmp.eq.s32.totalorder %v569, %v552
        %vm576 = vcmp.eq.s32.totalorder %v570, %v552
        %vm577 = vcmp.eq.s32.totalorder %v571, %v551
        %vm578 = vcmp.eq.s32.totalorder %v572, %v551
        %vm579 = vcmp.eq.s32.totalorder %v571, %v552
        %vm580 = vcmp.eq.s32.totalorder %v572, %v552
        %v581 = vsel %vm431, 1, 0
        %v582 = vrot.slane %v581, 1
        %v583 = vrot.slane %v581, 2
        %v584 = vrot.slane %v581, 3
        %v585 = vsel %vm556, %v581, %v582
        %v586 = vsel %vm558, %v583, %v584
        %v587 = vsel %vm560, %v585, %v586
        %v588 = vsel %vm562, %v581, %v582
        %v589 = vsel %vm564, %v583, %v584
        %v590 = vsel %vm566, %v588, %v589
        %v591 = vrot.slane %v590, 1
        %vm592 = vcmp.ne.s32.totalorder %v587, 0
        %vm593 = vcmp.ne.s32.totalorder %v591, 0
        %v594 = vsel %vm592, 1, 0
        %v595 = vsel %vm593, 1, 0
        %v596 = vperm.slane %v594, 0
        %v597 = vperm.slane %v594, 1
        %v598 = vperm.slane %v595, 0
        %v599 = vperm.slane %v595, 1
        %vm600 = vcmp.eq.s32.totalorder %v596, 1
        %vm601 = vcmp.eq.s32.totalorder %v597, 1
        %vm602 = vcmp.eq.s32.totalorder %v598, 1
        %vm603 = vcmp.eq.s32.totalorder %v599, 1
        %vm604 = vmand %vm573, %vm600
        %vm605 = vmand %vm574, %vm601
        %vm606 = vmand %vm575, %vm600
        %vm607 = vmand %vm576, %vm601
        %vm608 = vmand %vm577, %vm602
        %vm609 = vmand %vm578, %vm603
        %vm610 = vmand %vm579, %vm602
        %vm611 = vmand %vm580, %vm603
        %v612 = vsel %vm604, %v542, 0.0
        %v613 = vsel %vm605, %v543, 0.0
        %v614 = vsel %vm606, %v544, 0.0
        %v615 = vsel %vm607, %v545, 0.0
        %v616 = vsel %vm608, %v546, 0.0
        %v617 = vsel %vm609, %v547, 0.0
        %v618 = vsel %vm610, %v548, 0.0
        %v619 = vsel %vm611, %v549, 0.0
        %v620 = vsel %vm445, %v614, 0.0
        %v621 = vadd.f32 %v612, %v620
        %v622 = vrot.slane %v621, 4
        %v623 = vadd.f32 %v621, %v622
        %v624 = vrot.slane %v623, 2
        %v625 = vadd.f32 %v623, %v624
        %v626 = vrot.slane %v625, 1
        %v627 = vadd.f32 %v625, %v626
        %v628 = vsel %vm445, %v615, 0.0
        %v629 = vadd.f32 %v613, %v628
        %v630 = vrot.slane %v629, 4
        %v631 = vadd.f32 %v629, %v630
        %v632 = vrot.slane %v631, 2
        %v633 = vadd.f32 %v631, %v632
        %v634 = vrot.slane %v633, 1
        %v635 = vadd.f32 %v633, %v634
        %v636 = vsel %vm445, %v618, 0.0
        %v637 = vadd.f32 %v616, %v636
        %v638 = vrot.slane %v637, 4
        %v639 = vadd.f32 %v637, %v638
        %v640 = vrot.slane %v639, 2
        %v641 = vadd.f32 %v639, %v640
        %v642 = vrot.slane %v641, 1
        %v643 = vadd.f32 %v641, %v642
        %v644 = vsel %vm445, %v619, 0.0
        %v645 = vadd.f32 %v617, %v644
        %v646 = vrot.slane %v645, 4
        %v647 = vadd.f32 %v645, %v646
        %v648 = vrot.slane %v647, 2
        %v649 = vadd.f32 %v647, %v648
        %v650 = vrot.slane %v649, 1
        %v651 = vadd.f32 %v649, %v650
        %v652 = vsub.f32 0.0, %v627
        %v653 = vsub.f32 0.0, %v635
        %v654 = vsub.f32 0.0, %v643
        %v655 = vsub.f32 0.0, %v651
        %v660 = vsel %vm562, %v654, %v652
        %v661 = vsel %vm562, %v655, %v653
        %v664 = vsel %vm560, %v660, 0.0
        %v665 = vsel %vm560, %v661, 0.0
        %v666 = vadd.f32 %v664, %v665
        %667 = vadd.xlane.f32.xlu0 %v666
        %v668 = vpop.xlane.xlu0 %667
        %v669 = vadd.f32 %v430, 1e-10
        %v670 = vrcp.pop %v669
        %v671 = vmul.f32 %v669, %v670
        %v672 = vsub.f32 1.0, %v671
        %v673 = vmul.f32 %v670, %v672
        %v674 = vadd.f32 %v670, %v673
        %vm675 = vweird.f32 %v669
        %vm676 = vweird.f32 %v670
        %vm677 = vmor %vm675, %vm676
        %v678 = vsel %vm677, %v670, %v674
        %v679 = vand.u32 2147483647, %v669
        %vm680 = vcmp.eq.f32.partialorder %v679, 8.507059e+37
        %v681 = vand.u32 %v669, 2147483648
        %v682 = vor.u32 1.1754944e-38, %v681
        %v683 = vsel %vm680, %v682, %v678
        %v684 = vmul.f32 %v668, %v683
        %vm685 = vcmask 1024
        %v686 = vsel %vm685, %v684, 0.0
        %v687 = vrot.slane %v686, 4
        %v688 = vadd.f32 %v686, %v687
        %v689 = vrot.slane %v688, 2
        %v690 = vadd.f32 %v688, %v689
        %v691 = vrot.slane %v690, 1
        %v692 = vadd.f32 %v690, %v691
        %693 = vrot.lane.b32.xlu0 %v542, 127
        %v694 = vpop.permute.xlu0 %693
        %695 = vrot.lane.b32.xlu0 %v544, 127
        %v696 = vpop.permute.xlu0 %695
        %697 = vrot.lane.b32.xlu0 %v546, 127
        %v698 = vpop.permute.xlu0 %697
        %699 = vrot.lane.b32.xlu0 %v548, 127
        %v700 = vpop.permute.xlu0 %699
        %701 = vrot.lane.b32.xlu0 %v543, 127
        %v702 = vpop.permute.xlu0 %701
        %703 = vrot.lane.b32.xlu0 %v545, 127
        %v704 = vpop.permute.xlu0 %703
        %705 = vrot.lane.b32.xlu0 %v547, 127
        %v706 = vpop.permute.xlu0 %705
        %707 = vrot.lane.b32.xlu0 %v549, 127
        %v708 = vpop.permute.xlu0 %707
        %v709 = vlaneseq
        %v710 = vand.u32 %v709, 127
        %vm711 = vcmp.lt.s32.totalorder %v710, 127
        %v712 = vsel %vm711, %v694, %v702
        %v713 = vsel %vm711, %v696, %v704
        %v714 = vsel %vm711, %v698, %v706
        %v715 = vsel %vm711, %v700, %v708
        %v716 = vsel %vm711, %v702, %v694
        %v717 = vsel %vm711, %v704, %v696
        %v718 = vsel %vm711, %v706, %v698
        %v719 = vsel %vm711, %v708, %v700
        %721 = vst [vmem:[#allocation1] ss:$4 sm:$0xff] %v429
        %v722 = vld.sshfl [vmem:[#allocation1] sm:$0xff pattern:$0x73625140]
        %v723 = vld.sshfl [vmem:[#allocation1 + $0x8] sm:$0xff pattern:$0x73625140]
        %726 = vrot.lane.b32.xlu0 %v722, 127
        %v727 = vpop.permute.xlu0 %726
        %728 = vrot.lane.b32.xlu0 %v723, 127
        %v729 = vpop.permute.xlu0 %728
        %v730 = vsel %vm711, %v727, %v729
        %v731 = vsel %vm711, %v729, %v727
        %v732 = vadd.s32 %v710, 128
        %vm733 = vcmp.lt.s32.totalorder %v710, 255
        %vm734 = vcmp.lt.s32.totalorder %v732, 255
        %v735 = vsel %vm733, %v730, 0.0
        %v736 = vsel %vm734, %v731, 0.0
        %v737 = vsub.f32 %v712, %v542
        %v738 = vsub.f32 %v716, %v543
        %v739 = vsub.f32 %v713, %v544
        %v740 = vsub.f32 %v717, %v545
        %v741 = vsub.f32 %v714, %v546
        %v742 = vsub.f32 %v718, %v547
        %v743 = vsub.f32 %v715, %v548
        %v744 = vsub.f32 %v719, %v549
        %v745 = vmul.f32 %v737, %v737
        %v746 = vmul.f32 %v738, %v738
        %v747 = vmul.f32 %v739, %v739
        %v748 = vmul.f32 %v740, %v740
        %v749 = vmul.f32 %v741, %v741
        %v750 = vmul.f32 %v742, %v742
        %v751 = vmul.f32 %v743, %v743
        %v752 = vmul.f32 %v744, %v744
        %v753 = vmin.f32 %v745, 16.0
        %v754 = vmin.f32 %v746, 16.0
        %v755 = vmin.f32 %v747, 16.0
        %v756 = vmin.f32 %v748, 16.0
        %v757 = vmin.f32 %v749, 16.0
        %v758 = vmin.f32 %v750, 16.0
        %v759 = vmin.f32 %v751, 16.0
        %v760 = vmin.f32 %v752, 16.0
        %v763 = vrot.slane %v736, 7
        %v764 = vsel %vm556, %v735, %v763
        %v765 = vsel %vm562, %v735, %v763
        %v766 = vrot.slane %v765, 1
        %v767 = vperm.slane %v764, 0
        %v768 = vperm.slane %v764, 1
        %v769 = vperm.slane %v766, 0
        %v770 = vperm.slane %v766, 1
        %v775 = vmul.f32 %v753, %v767
        %v776 = vmul.f32 %v754, %v768
        %v777 = vmul.f32 %v755, %v767
        %v778 = vmul.f32 %v756, %v768
        %v779 = vmul.f32 %v757, %v769
        %v780 = vmul.f32 %v758, %v770
        %v781 = vmul.f32 %v759, %v769
        %v782 = vmul.f32 %v760, %v770
        %v783 = vadd.f32 %v775, %v776
        %784 = vadd.xlane.f32.xlu0 %v783
        %v785 = vpop.xlane.xlu0 %784
        %v786 = vsel %vm445, %v777, 0.0
        %v787 = vsel %vm445, %v778, 0.0
        %v788 = vadd.f32 %v786, %v787
        %789 = vadd.xlane.f32.xlu0 %v788
        %v790 = vpop.xlane.xlu0 %789
        %v791 = vadd.f32 %v779, %v780
        %792 = vadd.xlane.f32.xlu0 %v791
        %v793 = vpop.xlane.xlu0 %792
        %v794 = vsel %vm445, %v781, 0.0
        %v795 = vsel %vm445, %v782, 0.0
        %v796 = vadd.f32 %v794, %v795
        %797 = vadd.xlane.f32.xlu0 %v796
        %v798 = vpop.xlane.xlu0 %797
        %v803 = vperm.slane %v785, %v710
        %v804 = vadd.s32 %v710, 4294967288
        %v805 = vperm.slane %v790, %v804
        %vm806 = vcmask 130112
        %v807 = vsel %vm806, %v805, %v803
        %v808 = vperm.slane %v793, %v710
        %v809 = vperm.slane %v798, %v804
        %v810 = vsel %vm806, %v809, %v808
        %v811 = vsel %vm562, %v810, %v807
        %vm813 = vcmask 82944
        %v814 = vsel %vm813, %v811, 0.0
        %815 = vadd.xlane.f32.xlu0 %v814
        %v816 = vpop.xlane.xlu0 %815
        %v817 = vsel %vm560, %v816, 0.0
        %v818 = vrot.slane %v817, 4
        %v819 = vadd.f32 %v817, %v818
        %v820 = vrot.slane %v819, 2
        %v821 = vadd.f32 %v819, %v820
        %v822 = vrot.slane %v821, 1
        %v823 = vadd.f32 %v821, %v822
        %vm824 = vcmp.eq.s32.totalorder %v710, 1
        %826 = vset.pattern.permute.xlu0 0
        %827 = vperm.xlu0 %826, %v692
        %v828 = vpop.permute.xlu0 %827
        %v830 = vsel %vm824, %v828, 0.0
        %vm831 = vcmp.eq.s32.totalorder %v710, 2
        %v832 = vsel %vm831, %v823, 0.0
        %v833 = vadd.f32 %v830, %v832
        %p834 = scmp.eq.s32.totalorder %s27, 0
        // Predicated region
        $region45: #{tpu_custom_call.1} parent=43 // pred_check
          %p835 = pneg %p834
        $region46: #{tpu_custom_call.1} parent=43 // pred_check_branch
          %837 = sbr.rel (%p835) target = $region48
        $region47: #{tpu_custom_call.1} parent=43 // pred_region
          %838 = vst [vmem:[%s379] sm:$0x1] %v833
        $region48: #{tpu_custom_call.1} parent=43 // pred_fallthru
          _
        %p839 = scmp.eq.s32.totalorder %s26, 0
        // Predicated region
        $region49: #{tpu_custom_call.1} parent=43 // pred_check
          %p840 = pneg %p839
        $region50: #{tpu_custom_call.1} parent=43 // pred_check_branch
          %842 = sbr.rel (%p840) target = $region52
        $region51: #{tpu_custom_call.1} parent=43 // pred_region
          %844 = vst [vmem:[#allocation1] ss:$4 sm:$0xff] %v432
          %v845 = vld.sshfl [vmem:[#allocation1] sm:$0xff pattern:$0x73625140]
          %v846 = vld.sshfl [vmem:[#allocation1 + $0x8] sm:$0xff pattern:$0x73625140]
          %v849 = vsel %vm560, %v845, 0.0
          %v850 = vsel %vm560, %v846, 0.0
          %v851 = vadd.f32 %v849, %v850
          %852 = vadd.xlane.f32.xlu0 %v851
          %v853 = vpop.xlane.xlu0 %852
          %v854 = vsel %vm560, %v853, 0.0
          %v855 = vrot.slane %v854, 4
          %v856 = vadd.f32 %v854, %v855
          %v857 = vrot.slane %v856, 2
          %v858 = vadd.f32 %v856, %v857
          %v859 = vrot.slane %v858, 1
          %v860 = vadd.f32 %v858, %v859
          %v861 = vld [vmem:[%s379] sm:$0x1]
          %vm862 = vcmp.eq.s32.totalorder %v710, 3
          %v863 = vsel %vm862, %v860, 0.0
          %v864 = vadd.f32 %v861, %v863
          %865 = vst [vmem:[%s379] sm:$0x1] %v864
          // Predicated region
          $region53: #{tpu_custom_call.1} parent=51 // pred_check
            %p866 = pneg %p834
          $region54: #{tpu_custom_call.1} parent=51 // pred_check_branch
            %868 = sbr.rel (%p866) target = $region56
          $region55: #{tpu_custom_call.1} parent=51 // pred_region
            %v869 = vld [vmem:[%s383] sm:$0x3]
            %v870 = vld [vmem:[%s387] sm:$0x3]
            %vm871 = vcmp.ne.s32.totalorder %v870, 4294967196
            %v872 = vrot.slane %v870, 1
            %v873 = vperm.slane %v870, 0
            %v874 = vperm.slane %v872, 0
            %vm875 = vcmp.eq.s32.totalorder %v873, %v551
            %vm876 = vcmp.eq.s32.totalorder %v873, %v552
            %vm877 = vcmp.eq.s32.totalorder %v874, %v551
            %vm878 = vcmp.eq.s32.totalorder %v874, %v552
            %v879 = vsel %vm871, 1, 0
            %v880 = vrot.slane %v879, 1
            %vm881 = vcmp.ne.s32.totalorder %v880, 0
            %v882 = vsel %vm881, 1, 0
            %v883 = vperm.slane %v879, 0
            %v884 = vperm.slane %v882, 0
            %vm885 = vcmp.eq.s32.totalorder %v883, 1
            %vm886 = vcmp.eq.s32.totalorder %v884, 1
            %vm887 = vmand %vm875, %vm885
            %vm888 = vmand %vm876, %vm885
            %vm889 = vmand %vm877, %vm886
            %vm890 = vmand %vm878, %vm886
            %v891 = vsel %vm887, 1.0, 0.0
            %v892 = vsel %vm888, 1.0, 0.0
            %v893 = vsel %vm889, 1.0, 0.0
            %v894 = vsel %vm890, 1.0, 0.0
            %vm895 = vcmask 523264
            %v896 = vsel %vm895, %v891, 0.0
            %897 = vadd.xlane.f32.xlu0 %v896
            %v898 = vpop.xlane.xlu0 %897
            %vm899 = vcmask 518144
            %v900 = vsel %vm899, %v892, 0.0
            %901 = vadd.xlane.f32.xlu0 %v900
            %v902 = vpop.xlane.xlu0 %901
            %v903 = vsel %vm895, %v893, 0.0
            %904 = vadd.xlane.f32.xlu0 %v903
            %v905 = vpop.xlane.xlu0 %904
            %v906 = vsel %vm899, %v894, 0.0
            %907 = vadd.xlane.f32.xlu0 %v906
            %v908 = vpop.xlane.xlu0 %907
            %v909 = vmul.f32 %v898, 0.015625
            %v910 = vmul.f32 %v902, 0.015625
            %v911 = vmul.f32 %v905, 0.015625
            %v912 = vmul.f32 %v908, 0.015625
            %v917 = vperm.slane %v909, %v710
            %v918 = vperm.slane %v910, %v804
            %v919 = vsel %vm806, %v918, %v917
            %v920 = vperm.slane %v911, %v710
            %v921 = vperm.slane %v912, %v804
            %v922 = vsel %vm806, %v921, %v920
            %v923 = vsel %vm562, %v922, %v919
            %v925 = vsel %vm813, %v923, 0.0
            %926 = vadd.xlane.f32.xlu0 %v925
            %v927 = vpop.xlane.xlu0 %926
            %vm928 = vcmp.gt.f32.partialorder %v927, 0.0
            %v929 = vsel %vm928, 1.0, 0.0
            %v930 = vsel %vm813, %v869, -inf
            %931 = vmax.xlane.f32.xlu0 %v930
            %v932 = vpop.xlane.xlu0 %931
            %v933 = vsub.f32 %v869, %v932
            %v934 = vmul.f32 %v933, 1.442695
            %v935 = vpow.pop %v934
            %v936 = vsel %vm813, %v935, 0.0
            %937 = vadd.xlane.f32.xlu0 %v936
            %v938 = vpop.xlane.xlu0 %937
            %v939 = vlog2.pop %v938
            %v940 = vmul.f32 %v939, 0.6931472
            %v941 = vsub.f32 %v933, %v940
            %v942 = vmul.f32 %v941, %v923
            %v943 = vsel %vm813, %v942, 0.0
            %944 = vadd.xlane.f32.xlu0 %v943
            %v945 = vpop.xlane.xlu0 %944
            %v946 = vsub.f32 0.0, %v945
            %v947 = vmul.f32 %v946, %v929
            %v948 = vmul.f32 %v947, %v683
            %v949 = vsel %vm685, %v948, 0.0
            %v950 = vrot.slane %v949, 4
            %v951 = vadd.f32 %v949, %v950
            %v952 = vrot.slane %v951, 2
            %v953 = vadd.f32 %v951, %v952
            %v954 = vrot.slane %v953, 1
            %v955 = vadd.f32 %v953, %v954
            %v956 = vld [vmem:[%s379] sm:$0x1]
            %vm957 = vcmp.eq.s32.totalorder %v710, 0
            %959 = vset.pattern.permute.xlu0 0
            %960 = vperm.xlu0 %959, %v955
            %v961 = vpop.permute.xlu0 %960
            %v963 = vsel %vm957, %v961, 0.0
            %v964 = vadd.f32 %v956, %v963
            %965 = vst [vmem:[%s379] sm:$0x1] %v964
          $region56: #{tpu_custom_call.1} parent=51 // pred_fallthru
            _
        $region52: #{tpu_custom_call.1} parent=43 // pred_fallthru
          _
        %s966 = sand.u32 %s213, 1
        %s967 = scalar_lea.sflag [#allocation4], %s966
        %s968 = sand.u32 %s213, 1
        %s969 = scalar_lea.vmem [#allocation3], %s968
        // Predicated region
        $region57: #{tpu_custom_call.1} parent=43 // pred_check
          %p970 = pneg %p223
        $region58: #{tpu_custom_call.1} parent=43 // pred_check_branch
          %972 = sbr.rel (%p970) target = $region60
        $region59: #{tpu_custom_call.1} parent=43 // pred_region
          %974 = vsyncadd %s967, 0
          %s975 = smul.addr %s25, 4
          %s976 = sadd.s32 %s26, %s975
          %s977 = scalar_lea.hbm %s6, %s976
          %s979 = sshll.u32 %s969, 4
          %s980 = int_to_ptr.vmem [resolvable:$true] %s979
          %s981 = sshll.u32 %s977, 4
          %s982 = int_to_ptr.hbm [resolvable:$true] %s981
          %984 = dma.vmem_to_hbm [thread:$0]  %s980, 16, %s982, %s967
        $region60: #{tpu_custom_call.1} parent=43 // pred_fallthru
          _
      $region44: #{tpu_custom_call.1} parent=5 // pred_fallthru
        _
      %p985 = scmp.le.s32.totalorder 2, %s15
      // Predicated region
      $region61: #{tpu_custom_call.1} parent=5 // pred_check
        %p986 = pneg %p985
      $region62: #{tpu_custom_call.1} parent=5 // pred_check_branch
        %988 = sbr.rel (%p986) target = $region64
      $region63: #{tpu_custom_call.1} parent=5 // pred_region
        %s989 = ssub.s32 %s15, 2
        // Predicated region
        $region65: #{tpu_custom_call.1} parent=63 // pred_check
          %p990 = pneg %p229
        $region66: #{tpu_custom_call.1} parent=63 // pred_check_branch
          %992 = sbr.rel (%p990) target = $region68
        $region67: #{tpu_custom_call.1} parent=63 // pred_region
          %s993 = sand.u32 %s214, 1
          %s994 = scalar_lea.sflag [#allocation4], %s993
          %s995 = sand.u32 %s214, 1
          %s996 = scalar_lea.vmem [#allocation3], %s995
          %998 = dma.done %s994, 16
        $region68: #{tpu_custom_call.1} parent=63 // pred_fallthru
          _
      $region64: #{tpu_custom_call.1} parent=5 // pred_fallthru
        _
    $region6: #{tpu_custom_call.1} parent=1 // loop_footer
      %s19 = sadd.s32 1, %s15
    $region7: #{tpu_custom_call.1} parent=1 // loop_footer_branch
      %14 = sbr.rel target = $region3
    $region8: #{tpu_custom_call.1} parent=1 // loop_exit
      _
    %999 = vsyncpa [#allocation4], 1
    %s1000 = scalar_lea.sflag [#allocation4], 1
    %1001 = vsyncpa %s1000, 1

</llo_original>
